<compile_context>
chip_gen: v7x
topology: tpu7x:2x2x1
jax: 0.10.0
libtpu: 0.0.40
codegen_flags: <defaults>
</compile_context>

<pallas_src>
import jax
import jax.numpy as jnp
from jax.experimental import pallas as pl
from jax.experimental.pallas import tpu as pltpu


def mod_alpha_kernel(a_ref, o_ref):
    # a_ref: SMEM ref of shape (3,)  -> [a1, a2, a3]
    # o_ref: VMEM ref of shape (1, 6) (full-array block, single masked store)
    a1 = a_ref[0]
    a2 = a_ref[1]
    a3 = a_ref[2]

    # Lane index over the (1, 6) output row.
    lane = jax.lax.broadcasted_iota(jnp.int32, (1, 6), 1)
    pair = lane >> 1          # lane-pair index: 0 -> a1, 1 -> a2, 2 -> a3
    odd = (lane & 1) == 1     # odd lanes carry aX, even lanes carry 1-aX

    # 2 selects pick the alpha per lane pair, 1 select + 1 subtract applies
    # the even/odd flip.
    base = jnp.where(pair == 0, a1, jnp.where(pair == 1, a2, a3))
    o_ref[...] = jnp.where(odd, base, 1.0 - base)


def mod_alpha(alphas: jax.Array) -> jax.Array:
    """alphas: f32[3] = [alpha1, alpha2, alpha3]  ->  f32[1, 6]"""
    return pl.pallas_call(
        mod_alpha_kernel,
        out_shape=jax.ShapeDtypeStruct((1, 6), jnp.float32),
        in_specs=[pl.BlockSpec(memory_space=pltpu.MemorySpace.SMEM)],
        out_specs=pl.BlockSpec(memory_space=pltpu.MemorySpace.VMEM),
        cost_estimate=pl.CostEstimate(
            flops=10, transcendentals=0, bytes_accessed=36),
    )(alphas)


def mod_alpha_ref(alphas: jnp.ndarray) -> jnp.ndarray:
    """Pure-JAX reference mirroring the PyTorch forward."""
    rows = []
    for a in alphas:
        a_vec = jnp.stack([a, jnp.float32(0.0)])
        a_vec_ = jnp.stack([jnp.float32(0.0), a])
        rows.append(jnp.array([1.0, 0.0], jnp.float32) - a_vec + a_vec_)
    return jnp.concatenate(rows)[None, :]


if __name__ == "__main__":
    # Deterministic "parameters" (alpha1, alpha2, alpha3) from PRNGKey(0).
    key = jax.random.PRNGKey(0)
    alphas = jax.random.uniform(key, (3,), dtype=jnp.float32)

    out = mod_alpha(alphas)
    out = jax.block_until_ready(out)

    expected = mod_alpha_ref(alphas)
    assert out.shape == (1, 6), out.shape
    assert jnp.allclose(out, expected, atol=1e-6), (out, expected)
    print("KERNEL_OK")
</pallas_src>

<mosaic_0001>
module attributes {stable_mosaic.version = 11 : i64} {
  func.func @mod_alpha_kernel(%arg0: memref<3xf32, #tpu.memory_space<smem>>, %arg1: memref<1x6xf32, #tpu.memory_space<vmem>>) attributes {dimension_semantics = [], scalar_prefetch = 0 : i64, scratch_operands = 0 : i64, tpu.core_type = #tpu.core_type<tc>} {
    %c0 = arith.constant 0 : index
    %0 = memref.load %arg0[%c0] : memref<3xf32, #tpu.memory_space<smem>>
    %c1 = arith.constant 1 : index
    %1 = memref.load %arg0[%c1] : memref<3xf32, #tpu.memory_space<smem>>
    %c2 = arith.constant 2 : index
    %2 = memref.load %arg0[%c2] : memref<3xf32, #tpu.memory_space<smem>>
    %3 = tpu.iota {dimensions = array<i32: 1>} : vector<1x6xi32>
    %c1_i32 = arith.constant 1 : i32
    %4 = vector.broadcast %c1_i32 : i32 to vector<1x6xi32>
    %5 = arith.shrsi %3, %4 : vector<1x6xi32>
    %c1_i32_0 = arith.constant 1 : i32
    %6 = vector.broadcast %c1_i32_0 : i32 to vector<1x6xi32>
    %7 = arith.andi %3, %6 : vector<1x6xi32>
    %c1_i32_1 = arith.constant 1 : i32
    %8 = vector.broadcast %c1_i32_1 : i32 to vector<1x6xi32>
    %9 = arith.cmpi eq, %7, %8 : vector<1x6xi32>
    %c0_i32 = arith.constant 0 : i32
    %10 = vector.broadcast %c0_i32 : i32 to vector<1x6xi32>
    %11 = arith.cmpi eq, %5, %10 : vector<1x6xi32>
    %c1_i32_2 = arith.constant 1 : i32
    %12 = vector.broadcast %c1_i32_2 : i32 to vector<1x6xi32>
    %13 = arith.cmpi eq, %5, %12 : vector<1x6xi32>
    %14 = vector.broadcast %1 : f32 to vector<1x6xf32>
    %15 = vector.broadcast %2 : f32 to vector<1x6xf32>
    %16 = arith.select %13, %14, %15 : vector<1x6xi1>, vector<1x6xf32>
    %17 = vector.broadcast %0 : f32 to vector<1x6xf32>
    %18 = arith.select %11, %17, %16 : vector<1x6xi1>, vector<1x6xf32>
    %cst = arith.constant 1.000000e+00 : f32
    %19 = vector.broadcast %cst : f32 to vector<1x6xf32>
    %20 = arith.subf %19, %18 : vector<1x6xf32>
    %21 = arith.select %9, %18, %20 : vector<1x6xi1>, vector<1x6xf32>
    %c0_3 = arith.constant 0 : index
    %c0_4 = arith.constant 0 : index
    %22 = vector.load %arg1[%c0_3, %c0_4] : memref<1x6xf32, #tpu.memory_space<vmem>>, vector<1x6xf32>
    tpu.vector_store %arg1[%c0_3, %c0_4], %21 {strides = array<i32>} : memref<1x6xf32, #tpu.memory_space<vmem>>, vector<1x6xf32>,
    return
  }
}

</mosaic_0001>

<llo_original>
// kernel: tpu_custom_call.1
$region0: #{tpu_custom_call.1}
  #allocation0 [shape = 'u32[]', space=smem, size = 0x4, offset = 0x4, fixed_abs, tag = 'smem constant byte address 0x4 - core index']
  #allocation1 [shape = 'u32[144,128]{1,0:T(1,128)}', space=vmem, size = 0x12000, scoped, tag = 'internal scratch']
  %s0 = inlined_call_operand.hbm [shape: f32[3], index: 0, kind: input, shape index: {}]
  %s1 = inlined_call_operand.hbm [shape: f32[1,6], index: 1, kind: output, shape index: {}]
  %s2 = sld [smem:[#allocation0]]
  $region18: #{tpu_custom_call.1} parent=0
    _
  %s4 = ssub.s32 1, %s2
  %s5 = scalar_select 0, %s4, %s2
  $region1: #{tpu_custom_call.1} parent=0
    #allocation2 [shape = 'u8[512]{0}', space=smem, size = 0x200, scoped, tag = 'input window, operand 0, single buffered']
    #allocation3 [shape = 's32[1]{0}', space=sflag, size = 0x4, scoped, tag = 'scoped memory for tpu_custom_call.1']
    #allocation4 [shape = 's32[1]{0}', space=sflag, size = 0x4, scoped, tag = 'scoped memory for tpu_custom_call.1']
    #allocation5 [shape = 'u8[512]{0}', space=vmem, size = 0x400, scoped, tag = 'output window, operand 0, single buffered']
    %6 = vsyncpa [#allocation4], 0
    %7 = vsyncpa [#allocation3], 0
    // Predicated region
    $region2: #{tpu_custom_call.1} parent=1 // pred_check
      _
    $region3: #{tpu_custom_call.1} parent=1 // pred_check_branch
      %9 = sbr.rel (0) target = $region5
    $region4: #{tpu_custom_call.1} parent=1 // pred_region
      %s11 = ssub.s32 16, 16
      %12 = vsyncadd [#allocation4], %s11
      %15 = dma.hbm_to_smem %s0, 16, [#allocation2], [#allocation4]
    $region5: #{tpu_custom_call.1} parent=1 // pred_fallthru
      _
    // Predicated region
    $region6: #{tpu_custom_call.1} parent=1 // pred_check
      _
    $region7: #{tpu_custom_call.1} parent=1 // pred_check_branch
      %17 = sbr.rel (0) target = $region9
    $region8: #{tpu_custom_call.1} parent=1 // pred_region
      %18 = dma.done [#allocation4], 16
    $region9: #{tpu_custom_call.1} parent=1 // pred_fallthru
      _
    %19 = sfence
    %s20 = sld [smem:[#allocation2]]
    %s21 = sld [smem:[#allocation2 + $0x1]]
    %s22 = sld [smem:[#allocation2 + $0x2]]
    %v23 = vlaneseq
    %v24 = vand.u32 %v23, 127
    %v25 = vshra.s32 %v24, 1
    %v26 = vand.u32 %v24, 1
    %vm27 = vcmp.eq.s32.totalorder %v26, 1
    %vm28 = vcmp.eq.s32.totalorder %v25, 0
    %vm29 = vcmp.eq.s32.totalorder %v25, 1
    %v30 = vstv %s21
    %v31 = vstv %s22
    %v32 = vsel %vm29, %v30, %v31
    %v33 = vstv %s20
    %v34 = vsel %vm28, %v33, %v32
    %v35 = vsub.f32 1.0, %v34
    %v36 = vsel %vm27, %v34, %v35
    %vm37 = vcmask 40960
    %38 = vst.msk [vmem:[#allocation5] sm:$0x1] %vm37, %v36
    // Predicated region
    $region10: #{tpu_custom_call.1} parent=1 // pred_check
      _
    $region11: #{tpu_custom_call.1} parent=1 // pred_check_branch
      %40 = sbr.rel (0) target = $region13
    $region12: #{tpu_custom_call.1} parent=1 // pred_region
      %s42 = ssub.s32 16, 16
      %43 = vsyncadd [#allocation3], %s42
      %s45 = sshll.u32 [#allocation5], 4
      %s46 = int_to_ptr.vmem [resolvable:$true] %s45
      %48 = dma.vmem_to_hbm [thread:$0]  %s46, 16, %s1, [#allocation3]
    $region13: #{tpu_custom_call.1} parent=1 // pred_fallthru
      _
    // Predicated region
    $region14: #{tpu_custom_call.1} parent=1 // pred_check
      _
    $region15: #{tpu_custom_call.1} parent=1 // pred_check_branch
      %50 = sbr.rel (0) target = $region17
    $region16: #{tpu_custom_call.1} parent=1 // pred_region
      %51 = dma.done [#allocation3], 16
    $region17: #{tpu_custom_call.1} parent=1 // pred_fallthru
      _
    %52 = vsyncpa [#allocation3], 1
    %53 = vsyncpa [#allocation4], 1

</llo_original>
